<compile_context>
chip_gen: v7x
topology: tpu7x:2x2x1
jax: 0.10.0
libtpu: 0.0.40
codegen_flags: <defaults>
</compile_context>

<pallas_src>
import functools
import math

import jax
import jax.numpy as jnp
from jax import lax
from jax.experimental import pallas as pl
from jax.experimental.pallas import tpu as pltpu

_ALPHA = 0.25                                   # sigmoid focal loss alpha
_COS5DEG = math.cos(math.radians(5.0))          # cos(5 degrees)
_DEG_PER_RAD = 180.0 / math.pi


def _round_up(x, m):
    return (x + m - 1) // m * m


def _loss_kernel(vp_weight, inv_bcr, inv_bcp, inv_b9, inv_b,
                 cr, cp, off_pr, off_gr, off_rl, off_pl,
                 packed_ref, out_ref):
    x = packed_ref[...]                                     # (B, LANES) f32
    B, LANES = x.shape
    col = lax.broadcasted_iota(jnp.int32, (B, LANES), 1)
    colf = col.astype(jnp.float32)

    rho_mask = col < cr
    phi_mask = jnp.logical_and(col >= cr, col < cr + cp)

    # per-row labels (stored as exact small-int floats in two lanes)
    rho_lab = packed_ref[:, off_rl:off_rl + 1]              # (B, 1)
    phi_lab = packed_ref[:, off_pl:off_pl + 1]              # (B, 1)

    # fused one-hot targets for both heads over the whole slab
    rho_oh = jnp.logical_and(rho_mask, colf == rho_lab)
    phi_oh = jnp.logical_and(phi_mask, (colf - cr) == phi_lab)
    targets = jnp.logical_or(rho_oh, phi_oh).astype(jnp.float32)

    # ---- sigmoid focal loss, single-exp formulation (alpha=.25, gamma=2) ----
    e = jnp.exp(-jnp.abs(x))                                # 1 EUP exp / elem
    # TODO(synk): use jnp.log1p(e) if/when Mosaic guarantees a log1p lowering;
    # log(1+e) is numerically fine here since e <= 1.
    log_term = jnp.log(1.0 + e)                             # 1 EUP log / elem
    r = pl.reciprocal(1.0 + e, approx=True)                 # sigmoid(|x|), EUP
    p = jnp.where(x >= 0.0, r, e * r)                       # sigmoid(x), no ovf
    ce = jnp.maximum(x, 0.0) - x * targets + log_term       # stable BCE-w-logits
    p_t = p * targets + (1.0 - p) * (1.0 - targets)
    om = 1.0 - p_t
    alpha_t = _ALPHA * targets + (1.0 - _ALPHA) * (1.0 - targets)
    focal = alpha_t * (om * om) * ce

    rho_loss = jnp.sum(jnp.where(rho_mask, focal, 0.0)) * inv_bcr
    phi_loss = jnp.sum(jnp.where(phi_mask, focal, 0.0)) * inv_bcp
    vp_loss = rho_loss + phi_loss

    # ---- accuracies (argmax of sigmoid == argmax of logits) ----
    neg = jnp.float32(-jnp.inf)
    rho_m = jnp.where(rho_mask, x, neg)
    phi_m = jnp.where(phi_mask, x, neg)
    rho_max = jnp.max(rho_m, axis=1, keepdims=True)
    phi_max = jnp.max(phi_m, axis=1, keepdims=True)
    # lowest-index tie-break (torch.argmax tie-break is unspecified)
    rho_idx = jnp.min(jnp.where(rho_m == rho_max, col, LANES), axis=1,
                      keepdims=True)
    phi_idx = jnp.min(jnp.where(phi_m == phi_max, col, LANES), axis=1,
                      keepdims=True)
    rho_acc = jnp.sum((rho_idx.astype(jnp.float32) == rho_lab)
                      .astype(jnp.float32)) * inv_b * 100.0
    phi_acc = jnp.sum(((phi_idx - cr).astype(jnp.float32) == phi_lab)
                      .astype(jnp.float32)) * inv_b * 100.0

    # ---- rotation terms ----
    pr = packed_ref[:, off_pr:off_pr + 9]                   # (B, 9) row-major
    gr = packed_ref[:, off_gr:off_gr + 9]                   # (B, 9) row-major
    ip_loss = jnp.sum(jnp.abs(pr - gr)) * inv_b9            # nn.L1Loss()
    loss = vp_weight * vp_loss + ip_loss

    # trace(R_pred^T @ R_gt) == elementwise sum of products (no 3x3 matmul)
    trace = jnp.sum(pr * gr, axis=1, keepdims=True)         # (B, 1)
    cosang = jnp.clip((trace - 1.0) * 0.5, -1.0, 1.0)

    # acos via Abramowitz&Stegun 4.4.45 (|err| < 6.7e-5 rad ~ 0.004 deg)
    a = jnp.abs(cosang)
    poly = 1.5707288 + a * (-0.2121144 + a * (0.0742610 + a * (-0.0187293)))
    acos_abs = jnp.sqrt(jnp.maximum(1.0 - a, 0.0)) * poly
    ang_rad = jnp.where(cosang >= 0.0, acos_abs, jnp.pi - acos_abs)
    residual_mean_deg = jnp.sum(ang_rad) * _DEG_PER_RAD * inv_b
    # angle < 5deg  <=>  cos(angle) > cos(5deg)   (exact, no acos approx error)
    five_frac = jnp.sum((cosang > _COS5DEG).astype(jnp.float32)) * inv_b

    out_ref[0] = loss
    out_ref[1] = vp_loss
    out_ref[2] = ip_loss
    out_ref[3] = rho_acc
    out_ref[4] = phi_acc
    out_ref[5] = residual_mean_deg
    out_ref[6] = five_frac
    out_ref[7] = jnp.float32(0.0)


def loss_forward(pred, gt, vp_weight=1.0):
    rho_prob = pred['rho_prob'].astype(jnp.float32)          # (B, Cr)
    phi_prob = pred['phi_prob'].astype(jnp.float32)          # (B, Cp)
    B, cr = rho_prob.shape
    cp = phi_prob.shape[1]
    rho_lab_f = gt['rho_label'].reshape(B, 1).astype(jnp.float32)
    phi_lab_f = gt['phi_label'].reshape(B, 1).astype(jnp.float32)
    pr9 = pred['pred_rotation'].reshape(B, 9).astype(jnp.float32)
    gr9 = gt['rotation_label'].reshape(B, 9).astype(jnp.float32)

    # lane layout of the packed slab
    off_pr = _round_up(cr + cp, 8)          # pred rotation (9 lanes)
    off_gr = off_pr + 16                    # gt rotation (9 lanes)
    off_rl = off_gr + 16                    # rho label (1 lane)
    off_pl = off_rl + 1                     # phi label (1 lane)
    lanes = _round_up(off_pl + 1, 128)

    packed = jnp.concatenate(
        [rho_prob, phi_prob,
         jnp.zeros((B, off_pr - (cr + cp)), jnp.float32),
         pr9, jnp.zeros((B, off_gr - (off_pr + 9)), jnp.float32),
         gr9, jnp.zeros((B, off_rl - (off_gr + 9)), jnp.float32),
         rho_lab_f, phi_lab_f,
         jnp.zeros((B, lanes - (off_pl + 1)), jnp.float32)],
        axis=1)                                               # (B, lanes)

    kernel = functools.partial(
        _loss_kernel, float(vp_weight),
        1.0 / (B * cr), 1.0 / (B * cp), 1.0 / (B * 9), 1.0 / B,
        cr, cp, off_pr, off_gr, off_rl, off_pl)

    cost = pl.CostEstimate(
        flops=int(40 * B * lanes),
        transcendentals=int(3 * B * lanes),
        bytes_accessed=int(B * lanes * 4 + 8 * 4))

    scal = pl.pallas_call(
        kernel,
        out_shape=jax.ShapeDtypeStruct((8,), jnp.float32),
        in_specs=[pl.BlockSpec(memory_space=pltpu.MemorySpace.VMEM)],
        out_specs=pl.BlockSpec(memory_space=pltpu.MemorySpace.SMEM),
        cost_estimate=cost,
    )(packed)

    return {
        'loss': scal[0],
        'vp_loss': scal[1],
        'ip_loss': scal[2],
        'rho_acc': scal[3],
        'phi_acc': scal[4],
        'residual_angle_loss': scal[5],
        '5d_loss': scal[6],
    }


def _rot_from_axis_angle(axis, angle):
    """Rodrigues formula: (B,3) unit axes + (B,) angles -> (B,3,3)."""
    x, y, z = axis[:, 0], axis[:, 1], axis[:, 2]
    c = jnp.cos(angle)
    s = jnp.sin(angle)
    C = 1.0 - c
    R = jnp.stack([
        jnp.stack([c + x * x * C, x * y * C - z * s, x * z * C + y * s], axis=-1),
        jnp.stack([y * x * C + z * s, c + y * y * C, y * z * C - x * s], axis=-1),
        jnp.stack([z * x * C - y * s, z * y * C + x * s, c + z * z * C], axis=-1),
    ], axis=1)
    return R


if __name__ == "__main__":
    key = jax.random.PRNGKey(0)
    ks = jax.random.split(key, 8)

    B, CR, CP = 8, 32, 24
    rho_prob = jax.random.normal(ks[0], (B, CR), dtype=jnp.float32)
    phi_prob = jax.random.normal(ks[1], (B, CP), dtype=jnp.float32)
    rho_label = jax.random.randint(ks[2], (B, 1), 0, CR, dtype=jnp.int32)
    phi_label = jax.random.randint(ks[3], (B, 1), 0, CP, dtype=jnp.int32)

    # ground-truth rotations + small-angle-perturbed predicted rotations
    gt_axis = jax.random.normal(ks[4], (B, 3), dtype=jnp.float32)
    gt_axis = gt_axis / jnp.linalg.norm(gt_axis, axis=1, keepdims=True)
    gt_angle = jax.random.uniform(ks[5], (B,), minval=0.0, maxval=jnp.pi)
    gt_rot = _rot_from_axis_angle(gt_axis, gt_angle)

    d_axis = jax.random.normal(ks[6], (B, 3), dtype=jnp.float32)
    d_axis = d_axis / jnp.linalg.norm(d_axis, axis=1, keepdims=True)
    d_angle = jax.random.uniform(ks[7], (B,), minval=0.0,
                                 maxval=jnp.deg2rad(10.0))
    d_rot = _rot_from_axis_angle(d_axis, d_angle)
    pred_rot = jnp.einsum('bij,bjk->bik', gt_rot, d_rot)

    pred = {'rho_prob': rho_prob, 'phi_prob': phi_prob, 'pred_rotation': pred_rot}
    gt = {'rho_label': rho_label, 'phi_label': phi_label, 'rotation_label': gt_rot}

    out = loss_forward(pred, gt, vp_weight=1.0)   # cfg.vp_weight = 1.0
    jax.block_until_ready(out)
    print("KERNEL_OK")
</pallas_src>

<mosaic_0001>
module attributes {stable_mosaic.version = 11 : i64} {
  func.func @_loss_kernel(%arg0: memref<8x128xf32, #tpu.memory_space<vmem>>, %arg1: memref<8xf32, #tpu.memory_space<smem>>) attributes {dimension_semantics = [], scalar_prefetch = 0 : i64, scratch_operands = 0 : i64, tpu.core_type = #tpu.core_type<tc>} {
    %c0 = arith.constant 0 : index
    %c0_0 = arith.constant 0 : index
    %0 = vector.load %arg0[%c0, %c0_0] : memref<8x128xf32, #tpu.memory_space<vmem>>, vector<8x128xf32>
    %1 = tpu.iota {dimensions = array<i32: 1>} : vector<8x128xi32>
    %2 = arith.sitofp %1 : vector<8x128xi32> to vector<8x128xf32>
    %c32_i32 = arith.constant 32 : i32
    %3 = vector.broadcast %c32_i32 : i32 to vector<8x128xi32>
    %4 = arith.cmpi slt, %1, %3 : vector<8x128xi32>
    %c32_i32_1 = arith.constant 32 : i32
    %5 = vector.broadcast %c32_i32_1 : i32 to vector<8x128xi32>
    %6 = arith.cmpi sge, %1, %5 : vector<8x128xi32>
    %c56_i32 = arith.constant 56 : i32
    %7 = vector.broadcast %c56_i32 : i32 to vector<8x128xi32>
    %8 = arith.cmpi slt, %1, %7 : vector<8x128xi32>
    %9 = arith.andi %6, %8 : vector<8x128xi1>
    %c0_2 = arith.constant 0 : index
    %c88 = arith.constant 88 : index
    %10 = vector.load %arg0[%c0_2, %c88] : memref<8x128xf32, #tpu.memory_space<vmem>>, vector<8x1xf32>
    %c0_3 = arith.constant 0 : index
    %c89 = arith.constant 89 : index
    %11 = vector.load %arg0[%c0_3, %c89] : memref<8x128xf32, #tpu.memory_space<vmem>>, vector<8x1xf32>
    %12 = vector.broadcast %10 : vector<8x1xf32> to vector<8x128xf32>
    %13 = arith.cmpf oeq, %2, %12 : vector<8x128xf32>
    %14 = arith.andi %4, %13 : vector<8x128xi1>
    %cst = arith.constant 3.200000e+01 : f32
    %15 = vector.broadcast %cst : f32 to vector<8x128xf32>
    %16 = arith.subf %2, %15 : vector<8x128xf32>
    %17 = vector.broadcast %11 : vector<8x1xf32> to vector<8x128xf32>
    %18 = arith.cmpf oeq, %16, %17 : vector<8x128xf32>
    %19 = arith.andi %9, %18 : vector<8x128xi1>
    %20 = arith.ori %14, %19 : vector<8x128xi1>
    %21 = arith.extui %20 : vector<8x128xi1> to vector<8x128xi32>
    %22 = arith.sitofp %21 : vector<8x128xi32> to vector<8x128xf32>
    %23 = math.absf %0 : vector<8x128xf32>
    %cst_4 = arith.constant 0.000000e+00 : f32
    %24 = vector.broadcast %cst_4 : f32 to vector<8x128xf32>
    %25 = arith.subf %24, %23 : vector<8x128xf32>
    %26 = math.exp %25 : vector<8x128xf32>
    %cst_5 = arith.constant 1.000000e+00 : f32
    %27 = vector.broadcast %cst_5 : f32 to vector<8x128xf32>
    %28 = arith.addf %27, %26 : vector<8x128xf32>
    %29 = math.log %28 : vector<8x128xf32>
    %cst_6 = arith.constant 1.000000e+00 : f32
    %30 = vector.broadcast %cst_6 : f32 to vector<8x128xf32>
    %31 = arith.addf %30, %26 : vector<8x128xf32>
    %32 = tpu.reciprocal %31 {approx = true} : vector<8x128xf32> -> vector<8x128xf32>
    %cst_7 = arith.constant 0.000000e+00 : f32
    %33 = vector.broadcast %cst_7 : f32 to vector<8x128xf32>
    %34 = arith.cmpf oge, %0, %33 : vector<8x128xf32>
    %35 = arith.mulf %26, %32 : vector<8x128xf32>
    %36 = arith.select %34, %32, %35 : vector<8x128xi1>, vector<8x128xf32>
    %cst_8 = arith.constant 0.000000e+00 : f32
    %37 = vector.broadcast %cst_8 : f32 to vector<8x128xf32>
    %38 = arith.maximumf %0, %37 : vector<8x128xf32>
    %39 = arith.mulf %0, %22 : vector<8x128xf32>
    %40 = arith.subf %38, %39 : vector<8x128xf32>
    %41 = arith.addf %40, %29 : vector<8x128xf32>
    %42 = arith.mulf %36, %22 : vector<8x128xf32>
    %cst_9 = arith.constant 1.000000e+00 : f32
    %43 = vector.broadcast %cst_9 : f32 to vector<8x128xf32>
    %44 = arith.subf %43, %36 : vector<8x128xf32>
    %cst_10 = arith.constant 1.000000e+00 : f32
    %45 = vector.broadcast %cst_10 : f32 to vector<8x128xf32>
    %46 = arith.subf %45, %22 : vector<8x128xf32>
    %47 = arith.mulf %44, %46 : vector<8x128xf32>
    %48 = arith.addf %42, %47 : vector<8x128xf32>
    %cst_11 = arith.constant 1.000000e+00 : f32
    %49 = vector.broadcast %cst_11 : f32 to vector<8x128xf32>
    %50 = arith.subf %49, %48 : vector<8x128xf32>
    %cst_12 = arith.constant 2.500000e-01 : f32
    %51 = vector.broadcast %cst_12 : f32 to vector<8x128xf32>
    %52 = arith.mulf %51, %22 : vector<8x128xf32>
    %cst_13 = arith.constant 1.000000e+00 : f32
    %53 = vector.broadcast %cst_13 : f32 to vector<8x128xf32>
    %54 = arith.subf %53, %22 : vector<8x128xf32>
    %cst_14 = arith.constant 7.500000e-01 : f32
    %55 = vector.broadcast %cst_14 : f32 to vector<8x128xf32>
    %56 = arith.mulf %55, %54 : vector<8x128xf32>
    %57 = arith.addf %52, %56 : vector<8x128xf32>
    %58 = arith.mulf %50, %50 : vector<8x128xf32>
    %59 = arith.mulf %57, %58 : vector<8x128xf32>
    %60 = arith.mulf %59, %41 : vector<8x128xf32>
    %cst_15 = arith.constant 0.000000e+00 : f32
    %61 = vector.broadcast %cst_15 : f32 to vector<8x128xf32>
    %62 = arith.select %4, %60, %61 : vector<8x128xi1>, vector<8x128xf32>
    %63 = vector.shape_cast %62 : vector<8x128xf32> to vector<1x8x128xf32>
    %cst_16 = arith.constant dense<0.000000e+00> : vector<1xf32>
    %64 = vector.multi_reduction <add>, %63, %cst_16 [1, 2] : vector<1x8x128xf32> to vector<1xf32>
    %65 = vector.shape_cast %64 : vector<1xf32> to vector<1x1x1xf32>
    %66 = vector.extract %65[0, 0, 0] : f32 from vector<1x1x1xf32>
    %cst_17 = arith.constant 3.906250e-03 : f32
    %67 = arith.mulf %66, %cst_17 : f32
    %cst_18 = arith.constant 0.000000e+00 : f32
    %68 = vector.broadcast %cst_18 : f32 to vector<8x128xf32>
    %69 = arith.select %9, %60, %68 : vector<8x128xi1>, vector<8x128xf32>
    %70 = vector.shape_cast %69 : vector<8x128xf32> to vector<1x8x128xf32>
    %cst_19 = arith.constant dense<0.000000e+00> : vector<1xf32>
    %71 = vector.multi_reduction <add>, %70, %cst_19 [1, 2] : vector<1x8x128xf32> to vector<1xf32>
    %72 = vector.shape_cast %71 : vector<1xf32> to vector<1x1x1xf32>
    %73 = vector.extract %72[0, 0, 0] : f32 from vector<1x1x1xf32>
    %cst_20 = arith.constant 0.00520833349 : f32
    %74 = arith.mulf %73, %cst_20 : f32
    %75 = arith.addf %67, %74 : f32
    %cst_21 = arith.constant 0xFF800000 : f32
    %76 = vector.broadcast %cst_21 : f32 to vector<8x128xf32>
    %77 = arith.select %4, %0, %76 : vector<8x128xi1>, vector<8x128xf32>
    %cst_22 = arith.constant 0xFF800000 : f32
    %78 = vector.broadcast %cst_22 : f32 to vector<8x128xf32>
    %79 = arith.select %9, %0, %78 : vector<8x128xi1>, vector<8x128xf32>
    %cst_23 = arith.constant dense<0xFF800000> : vector<8xf32>
    %80 = vector.multi_reduction <maximumf>, %77, %cst_23 [1] : vector<8x128xf32> to vector<8xf32>
    %81 = vector.shape_cast %80 : vector<8xf32> to vector<8x1xf32>
    %cst_24 = arith.constant dense<0xFF800000> : vector<8xf32>
    %82 = vector.multi_reduction <maximumf>, %79, %cst_24 [1] : vector<8x128xf32> to vector<8xf32>
    %83 = vector.shape_cast %82 : vector<8xf32> to vector<8x1xf32>
    %84 = vector.broadcast %81 : vector<8x1xf32> to vector<8x128xf32>
    %85 = arith.cmpf oeq, %77, %84 : vector<8x128xf32>
    %c128_i32 = arith.constant 128 : i32
    %86 = vector.broadcast %c128_i32 : i32 to vector<8x128xi32>
    %87 = arith.select %85, %1, %86 : vector<8x128xi1>, vector<8x128xi32>
    %cst_25 = arith.constant dense<2147483647> : vector<8xi32>
    %88 = vector.multi_reduction <minsi>, %87, %cst_25 [1] : vector<8x128xi32> to vector<8xi32>
    %89 = vector.shape_cast %88 : vector<8xi32> to vector<8x1xi32>
    %90 = vector.broadcast %83 : vector<8x1xf32> to vector<8x128xf32>
    %91 = arith.cmpf oeq, %79, %90 : vector<8x128xf32>
    %c128_i32_26 = arith.constant 128 : i32
    %92 = vector.broadcast %c128_i32_26 : i32 to vector<8x128xi32>
    %93 = arith.select %91, %1, %92 : vector<8x128xi1>, vector<8x128xi32>
    %cst_27 = arith.constant dense<2147483647> : vector<8xi32>
    %94 = vector.multi_reduction <minsi>, %93, %cst_27 [1] : vector<8x128xi32> to vector<8xi32>
    %95 = vector.shape_cast %94 : vector<8xi32> to vector<8x1xi32>
    %96 = arith.sitofp %89 : vector<8x1xi32> to vector<8x1xf32>
    %97 = arith.cmpf oeq, %96, %10 : vector<8x1xf32>
    %98 = arith.extui %97 : vector<8x1xi1> to vector<8x1xi32>
    %99 = arith.sitofp %98 : vector<8x1xi32> to vector<8x1xf32>
    %100 = vector.shape_cast %99 : vector<8x1xf32> to vector<1x8x1xf32>
    %cst_28 = arith.constant dense<0.000000e+00> : vector<1xf32>
    %101 = vector.multi_reduction <add>, %100, %cst_28 [1, 2] : vector<1x8x1xf32> to vector<1xf32>
    %102 = vector.shape_cast %101 : vector<1xf32> to vector<1x1x1xf32>
    %103 = vector.extract %102[0, 0, 0] : f32 from vector<1x1x1xf32>
    %cst_29 = arith.constant 1.250000e-01 : f32
    %104 = arith.mulf %103, %cst_29 : f32
    %cst_30 = arith.constant 1.000000e+02 : f32
    %105 = arith.mulf %104, %cst_30 : f32
    %c32_i32_31 = arith.constant 32 : i32
    %106 = vector.broadcast %c32_i32_31 : i32 to vector<8x1xi32>
    %107 = arith.subi %95, %106 : vector<8x1xi32>
    %108 = arith.sitofp %107 : vector<8x1xi32> to vector<8x1xf32>
    %109 = arith.cmpf oeq, %108, %11 : vector<8x1xf32>
    %110 = arith.extui %109 : vector<8x1xi1> to vector<8x1xi32>
    %111 = arith.sitofp %110 : vector<8x1xi32> to vector<8x1xf32>
    %112 = vector.shape_cast %111 : vector<8x1xf32> to vector<1x8x1xf32>
    %cst_32 = arith.constant dense<0.000000e+00> : vector<1xf32>
    %113 = vector.multi_reduction <add>, %112, %cst_32 [1, 2] : vector<1x8x1xf32> to vector<1xf32>
    %114 = vector.shape_cast %113 : vector<1xf32> to vector<1x1x1xf32>
    %115 = vector.extract %114[0, 0, 0] : f32 from vector<1x1x1xf32>
    %cst_33 = arith.constant 1.250000e-01 : f32
    %116 = arith.mulf %115, %cst_33 : f32
    %cst_34 = arith.constant 1.000000e+02 : f32
    %117 = arith.mulf %116, %cst_34 : f32
    %c0_35 = arith.constant 0 : index
    %c56 = arith.constant 56 : index
    %118 = vector.load %arg0[%c0_35, %c56] : memref<8x128xf32, #tpu.memory_space<vmem>>, vector<8x9xf32>
    %c0_36 = arith.constant 0 : index
    %c72 = arith.constant 72 : index
    %119 = vector.load %arg0[%c0_36, %c72] : memref<8x128xf32, #tpu.memory_space<vmem>>, vector<8x9xf32>
    %120 = arith.subf %118, %119 : vector<8x9xf32>
    %121 = math.absf %120 : vector<8x9xf32>
    %122 = vector.shape_cast %121 : vector<8x9xf32> to vector<1x8x9xf32>
    %cst_37 = arith.constant dense<0.000000e+00> : vector<1xf32>
    %123 = vector.multi_reduction <add>, %122, %cst_37 [1, 2] : vector<1x8x9xf32> to vector<1xf32>
    %124 = vector.shape_cast %123 : vector<1xf32> to vector<1x1x1xf32>
    %125 = vector.extract %124[0, 0, 0] : f32 from vector<1x1x1xf32>
    %cst_38 = arith.constant 0.013888889 : f32
    %126 = arith.mulf %125, %cst_38 : f32
    %cst_39 = arith.constant 1.000000e+00 : f32
    %127 = arith.mulf %cst_39, %75 : f32
    %128 = arith.addf %127, %126 : f32
    %129 = arith.mulf %118, %119 : vector<8x9xf32>
    %cst_40 = arith.constant dense<0.000000e+00> : vector<8xf32>
    %130 = vector.multi_reduction <add>, %129, %cst_40 [1] : vector<8x9xf32> to vector<8xf32>
    %131 = vector.shape_cast %130 : vector<8xf32> to vector<8x1xf32>
    %cst_41 = arith.constant 1.000000e+00 : f32
    %132 = vector.broadcast %cst_41 : f32 to vector<8x1xf32>
    %133 = arith.subf %131, %132 : vector<8x1xf32>
    %cst_42 = arith.constant 5.000000e-01 : f32
    %134 = vector.broadcast %cst_42 : f32 to vector<8x1xf32>
    %135 = arith.mulf %133, %134 : vector<8x1xf32>
    %cst_43 = arith.constant -1.000000e+00 : f32
    %cst_44 = arith.constant 1.000000e+00 : f32
    %136 = vector.broadcast %cst_43 : f32 to vector<8x1xf32>
    %137 = arith.maximumf %136, %135 : vector<8x1xf32>
    %138 = vector.broadcast %cst_44 : f32 to vector<8x1xf32>
    %139 = arith.minimumf %138, %137 : vector<8x1xf32>
    %140 = math.absf %139 : vector<8x1xf32>
    %cst_45 = arith.constant -1.872930e-02 : f32
    %141 = vector.broadcast %cst_45 : f32 to vector<8x1xf32>
    %142 = arith.mulf %140, %141 : vector<8x1xf32>
    %cst_46 = arith.constant 7.426100e-02 : f32
    %143 = vector.broadcast %cst_46 : f32 to vector<8x1xf32>
    %144 = arith.addf %143, %142 : vector<8x1xf32>
    %145 = arith.mulf %140, %144 : vector<8x1xf32>
    %cst_47 = arith.constant -0.212114394 : f32
    %146 = vector.broadcast %cst_47 : f32 to vector<8x1xf32>
    %147 = arith.addf %146, %145 : vector<8x1xf32>
    %148 = arith.mulf %140, %147 : vector<8x1xf32>
    %cst_48 = arith.constant 1.57072878 : f32
    %149 = vector.broadcast %cst_48 : f32 to vector<8x1xf32>
    %150 = arith.addf %149, %148 : vector<8x1xf32>
    %cst_49 = arith.constant 1.000000e+00 : f32
    %151 = vector.broadcast %cst_49 : f32 to vector<8x1xf32>
    %152 = arith.subf %151, %140 : vector<8x1xf32>
    %cst_50 = arith.constant 0.000000e+00 : f32
    %153 = vector.broadcast %cst_50 : f32 to vector<8x1xf32>
    %154 = arith.maximumf %152, %153 : vector<8x1xf32>
    %155 = math.sqrt %154 : vector<8x1xf32>
    %156 = arith.mulf %155, %150 : vector<8x1xf32>
    %cst_51 = arith.constant 0.000000e+00 : f32
    %157 = vector.broadcast %cst_51 : f32 to vector<8x1xf32>
    %158 = arith.cmpf oge, %139, %157 : vector<8x1xf32>
    %cst_52 = arith.constant 3.14159274 : f32
    %159 = vector.broadcast %cst_52 : f32 to vector<8x1xf32>
    %160 = arith.subf %159, %156 : vector<8x1xf32>
    %161 = arith.select %158, %156, %160 : vector<8x1xi1>, vector<8x1xf32>
    %162 = vector.shape_cast %161 : vector<8x1xf32> to vector<1x8x1xf32>
    %cst_53 = arith.constant dense<0.000000e+00> : vector<1xf32>
    %163 = vector.multi_reduction <add>, %162, %cst_53 [1, 2] : vector<1x8x1xf32> to vector<1xf32>
    %164 = vector.shape_cast %163 : vector<1xf32> to vector<1x1x1xf32>
    %165 = vector.extract %164[0, 0, 0] : f32 from vector<1x1x1xf32>
    %cst_54 = arith.constant 57.2957802 : f32
    %166 = arith.mulf %165, %cst_54 : f32
    %cst_55 = arith.constant 1.250000e-01 : f32
    %167 = arith.mulf %166, %cst_55 : f32
    %cst_56 = arith.constant 0.99619472 : f32
    %168 = vector.broadcast %cst_56 : f32 to vector<8x1xf32>
    %169 = arith.cmpf ogt, %139, %168 : vector<8x1xf32>
    %170 = arith.extui %169 : vector<8x1xi1> to vector<8x1xi32>
    %171 = arith.sitofp %170 : vector<8x1xi32> to vector<8x1xf32>
    %172 = vector.shape_cast %171 : vector<8x1xf32> to vector<1x8x1xf32>
    %cst_57 = arith.constant dense<0.000000e+00> : vector<1xf32>
    %173 = vector.multi_reduction <add>, %172, %cst_57 [1, 2] : vector<1x8x1xf32> to vector<1xf32>
    %174 = vector.shape_cast %173 : vector<1xf32> to vector<1x1x1xf32>
    %175 = vector.extract %174[0, 0, 0] : f32 from vector<1x1x1xf32>
    %cst_58 = arith.constant 1.250000e-01 : f32
    %176 = arith.mulf %175, %cst_58 : f32
    %c0_59 = arith.constant 0 : index
    %177 = memref.load %arg1[%c0_59] : memref<8xf32, #tpu.memory_space<smem>>
    memref.store %128, %arg1[%c0_59] : memref<8xf32, #tpu.memory_space<smem>>
    %c1 = arith.constant 1 : index
    %178 = memref.load %arg1[%c1] : memref<8xf32, #tpu.memory_space<smem>>
    memref.store %75, %arg1[%c1] : memref<8xf32, #tpu.memory_space<smem>>
    %c2 = arith.constant 2 : index
    %179 = memref.load %arg1[%c2] : memref<8xf32, #tpu.memory_space<smem>>
    memref.store %126, %arg1[%c2] : memref<8xf32, #tpu.memory_space<smem>>
    %c3 = arith.constant 3 : index
    %180 = memref.load %arg1[%c3] : memref<8xf32, #tpu.memory_space<smem>>
    memref.store %105, %arg1[%c3] : memref<8xf32, #tpu.memory_space<smem>>
    %c4 = arith.constant 4 : index
    %181 = memref.load %arg1[%c4] : memref<8xf32, #tpu.memory_space<smem>>
    memref.store %117, %arg1[%c4] : memref<8xf32, #tpu.memory_space<smem>>
    %c5 = arith.constant 5 : index
    %182 = memref.load %arg1[%c5] : memref<8xf32, #tpu.memory_space<smem>>
    memref.store %167, %arg1[%c5] : memref<8xf32, #tpu.memory_space<smem>>
    %c6 = arith.constant 6 : index
    %183 = memref.load %arg1[%c6] : memref<8xf32, #tpu.memory_space<smem>>
    memref.store %176, %arg1[%c6] : memref<8xf32, #tpu.memory_space<smem>>
    %cst_60 = arith.constant 0.000000e+00 : f32
    %c7 = arith.constant 7 : index
    %184 = memref.load %arg1[%c7] : memref<8xf32, #tpu.memory_space<smem>>
    memref.store %cst_60, %arg1[%c7] : memref<8xf32, #tpu.memory_space<smem>>
    return
  }
}

</mosaic_0001>

<llo_original>
// kernel: tpu_custom_call.1
$region0: #{tpu_custom_call.1}
  #allocation0 [shape = 'u32[]', space=smem, size = 0x4, offset = 0x4, fixed_abs, tag = 'smem constant byte address 0x4 - core index']
  #allocation1 [shape = 'u32[144,128]{1,0:T(1,128)}', space=vmem, size = 0x12000, scoped, tag = 'internal scratch']
  %s0 = inlined_call_operand.hbm [shape: f32[8,128], index: 0, kind: input, shape index: {}]
  %s1 = inlined_call_operand.hbm [shape: f32[8], index: 1, kind: output, shape index: {}]
  %s2 = sld [smem:[#allocation0]]
  $region18: #{tpu_custom_call.1} parent=0
    _
  %s4 = ssub.s32 1, %s2
  %s5 = scalar_select 0, %s4, %s2
  $region1: #{tpu_custom_call.1} parent=0
    #allocation2 [shape = 'u8[4096]{0}', space=vmem, size = 0x1000, scoped, tag = 'input window, operand 0, single buffered']
    #allocation3 [shape = 's32[1]{0}', space=sflag, size = 0x4, scoped, tag = 'scoped memory for tpu_custom_call.1']
    #allocation4 [shape = 's32[1]{0}', space=sflag, size = 0x4, scoped, tag = 'scoped memory for tpu_custom_call.1']
    #allocation5 [shape = 'u8[512]{0}', space=smem, size = 0x200, scoped, tag = 'output window, operand 0, single buffered']
    %6 = vsyncpa [#allocation3], 0
    %7 = vsyncpa [#allocation4], 0
    // Predicated region
    $region2: #{tpu_custom_call.1} parent=1 // pred_check
      _
    $region3: #{tpu_custom_call.1} parent=1 // pred_check_branch
      %9 = sbr.rel (0) target = $region5
    $region4: #{tpu_custom_call.1} parent=1 // pred_region
      %s11 = ssub.s32 128, 128
      %12 = vsyncadd [#allocation3], %s11
      %s14 = sshll.u32 [#allocation2], 4
      %s15 = int_to_ptr.vmem [resolvable:$true] %s14
      %17 = dma.hbm_to_vmem [thread:$0]  %s0, 128, %s15, [#allocation3]
    $region5: #{tpu_custom_call.1} parent=1 // pred_fallthru
      _
    // Predicated region
    $region6: #{tpu_custom_call.1} parent=1 // pred_check
      _
    $region7: #{tpu_custom_call.1} parent=1 // pred_check_branch
      %19 = sbr.rel (0) target = $region9
    $region8: #{tpu_custom_call.1} parent=1 // pred_region
      %20 = dma.done [#allocation3], 128
    $region9: #{tpu_custom_call.1} parent=1 // pred_fallthru
      _
    %v21 = vld [vmem:[#allocation2] sm:$0xff]
    %v22 = vlaneseq
    %v23 = vand.u32 %v22, 127
    %v24 = vcvt.s32.f32 %v23
    %vm25 = vcmp.lt.s32.totalorder %v23, 32
    %vm26 = vcmp.ge.s32.totalorder %v23, 32
    %vm27 = vcmp.lt.s32.totalorder %v23, 56
    %vm28 = vmand %vm26, %vm27
    %30 = vset.pattern.permute.xlu0 88
    %31 = vperm.xlu0 %30, %v21
    %v32 = vpop.permute.xlu0 %31
    %vm34 = vcmp.eq.f32.partialorder %v24, %v32
    %vm35 = vmand %vm25, %vm34
    %v36 = vsub.f32 %v24, 32.0
    %37 = vset.pattern.permute.xlu0 89
    %38 = vperm.xlu0 %37, %v21
    %v39 = vpop.permute.xlu0 %38
    %vm41 = vcmp.eq.f32.partialorder %v36, %v39
    %vm42 = vmand %vm28, %vm41
    %vm43 = vmor %vm35, %vm42
    %v44 = vsel %vm43, 1, 0
    %v45 = vcvt.s32.f32 %v44
    %v46 = vand.u32 2147483647, %v21
    %v47 = vsub.f32 0.0, %v46
    %v48 = vmul.f32 %v47, 1.442695
    %v49 = vpow.pop %v48
    %v50 = vadd.f32 %v49, 1.0
    %v51 = vlog2.pop %v50
    %v52 = vmul.f32 %v51, 0.6931472
    %v53 = vrcp.pop %v50
    %vm54 = vcmp.ge.f32.partialorder %v21, 0.0
    %v55 = vmul.f32 %v49, %v53
    %v56 = vsel %vm54, %v53, %v55
    %v57 = vmax.f32 %v21, 0.0
    %v58 = vmul.f32 %v21, %v45
    %v59 = vsub.f32 %v57, %v58
    %v60 = vadd.f32 %v59, %v52
    %v61 = vmul.f32 %v56, %v45
    %v62 = vsub.f32 1.0, %v56
    %v63 = vsub.f32 1.0, %v45
    %v64 = vmul.f32 %v62, %v63
    %v65 = vadd.f32 %v61, %v64
    %v66 = vsub.f32 1.0, %v65
    %v67 = vmul.f32 %v45, 0.25
    %v68 = vmul.f32 %v63, 0.75
    %v69 = vadd.f32 %v67, %v68
    %v70 = vmul.f32 %v66, %v66
    %v71 = vmul.f32 %v69, %v70
    %v72 = vmul.f32 %v71, %v60
    %v73 = vsel %vm25, %v72, 0.0
    %74 = vadd.xlane.f32.xlu0 %v73
    %v75 = vpop.xlane.xlu0 %74
    %v76 = vrot.slane %v75, 4
    %v77 = vadd.f32 %v75, %v76
    %v78 = vrot.slane %v77, 2
    %v79 = vadd.f32 %v77, %v78
    %v80 = vrot.slane %v79, 1
    %v81 = vadd.f32 %v79, %v80
    %s82 = vtos %v81
    %s83 = smul.f32 %s82, 0.00390625
    %v84 = vsel %vm28, %v72, 0.0
    %85 = vadd.xlane.f32.xlu0 %v84
    %v86 = vpop.xlane.xlu0 %85
    %v87 = vrot.slane %v86, 4
    %v88 = vadd.f32 %v86, %v87
    %v89 = vrot.slane %v88, 2
    %v90 = vadd.f32 %v88, %v89
    %v91 = vrot.slane %v90, 1
    %v92 = vadd.f32 %v90, %v91
    %s93 = vtos %v92
    %s94 = smul.f32 %s93, 0.0052083335
    %s95 = sadd.f32 %s83, %s94
    %v96 = vsel %vm25, %v21, -inf
    %v97 = vsel %vm28, %v21, -inf
    %98 = vmax.xlane.f32.xlu0 %v96
    %v99 = vpop.xlane.xlu0 %98
    %100 = vmax.xlane.f32.xlu0 %v97
    %v101 = vpop.xlane.xlu0 %100
    %vm102 = vcmp.eq.f32.partialorder %v96, %v99
    %v103 = vsel %vm102, %v23, 128
    %v104 = vand.u32 %v103, 65535
    %v105 = vshra.s32 %v103, 16
    %v106 = vcvt.s32.f32 %v104
    %v107 = vcvt.s32.f32 %v105
    %108 = vmin.xlane.f32.xlu0 %v107
    %v109 = vpop.xlane.xlu0 %108
    %vm110 = vcmp.eq.f32.partialorder %v107, %v109
    %v111 = vsel %vm110, %v106, inf
    %112 = vmin.xlane.f32.xlu0 %v111
    %v113 = vpop.xlane.xlu0 %112
    %v114 = vcvt.f32.s32 %v113
    %v115 = vcvt.f32.s32 %v109
    %v116 = vshll.u32 %v115, 16
    %v117 = vadd.s32 %v116, %v114
    %vm118 = vcmp.eq.f32.partialorder %v97, %v101
    %v119 = vsel %vm118, %v23, 128
    %v120 = vand.u32 %v119, 65535
    %v121 = vshra.s32 %v119, 16
    %v122 = vcvt.s32.f32 %v120
    %v123 = vcvt.s32.f32 %v121
    %124 = vmin.xlane.f32.xlu0 %v123
    %v125 = vpop.xlane.xlu0 %124
    %vm126 = vcmp.eq.f32.partialorder %v123, %v125
    %v127 = vsel %vm126, %v122, inf
    %128 = vmin.xlane.f32.xlu0 %v127
    %v129 = vpop.xlane.xlu0 %128
    %v130 = vcvt.f32.s32 %v129
    %v131 = vcvt.f32.s32 %v125
    %v132 = vshll.u32 %v131, 16
    %v133 = vadd.s32 %v132, %v130
    %v134 = vcvt.s32.f32 %v117
    %vm135 = vcmp.eq.f32.partialorder %v134, %v21
    %v136 = vsel %vm135, 1, 0
    %v137 = vcvt.s32.f32 %v136
    %139 = vrot.lane.b32.xlu0 %v137, 40
    %v140 = vpop.permute.xlu0 %139
    %vm142 = vcmask 7168
    %v143 = vsel %vm142, %v140, 0.0
    %144 = vadd.xlane.f32.xlu0 %v143
    %v145 = vpop.xlane.xlu0 %144
    %v146 = vrot.slane %v145, 4
    %v147 = vadd.f32 %v145, %v146
    %v148 = vrot.slane %v147, 2
    %v149 = vadd.f32 %v147, %v148
    %v150 = vrot.slane %v149, 1
    %v151 = vadd.f32 %v149, %v150
    %s152 = vtos %v151
    %s153 = smul.f32 %s152, 0.125
    %s154 = smul.f32 %s153, 100.0
    %v155 = vsub.s32 %v133, 32
    %v156 = vcvt.s32.f32 %v155
    %vm157 = vcmp.eq.f32.partialorder %v156, %v21
    %v158 = vsel %vm157, 1, 0
    %v159 = vcvt.s32.f32 %v158
    %161 = vrot.lane.b32.xlu0 %v159, 39
    %v162 = vpop.permute.xlu0 %161
    %v164 = vsel %vm142, %v162, 0.0
    %165 = vadd.xlane.f32.xlu0 %v164
    %v166 = vpop.xlane.xlu0 %165
    %v167 = vrot.slane %v166, 4
    %v168 = vadd.f32 %v166, %v167
    %v169 = vrot.slane %v168, 2
    %v170 = vadd.f32 %v168, %v169
    %v171 = vrot.slane %v170, 1
    %v172 = vadd.f32 %v170, %v171
    %s173 = vtos %v172
    %s174 = smul.f32 %s173, 0.125
    %s175 = smul.f32 %s174, 100.0
    %176 = vrot.lane.b32.xlu0 %v21, 112
    %v177 = vpop.permute.xlu0 %176
    %v179 = vsub.f32 %v21, %v177
    %v180 = vand.u32 2147483647, %v179
    %182 = vrot.lane.b32.xlu0 %v180, 72
    %v183 = vpop.permute.xlu0 %182
    %vm185 = vcmask 72704
    %v186 = vsel %vm185, %v183, 0.0
    %187 = vadd.xlane.f32.xlu0 %v186
    %v188 = vpop.xlane.xlu0 %187
    %v189 = vrot.slane %v188, 4
    %v190 = vadd.f32 %v188, %v189
    %v191 = vrot.slane %v190, 2
    %v192 = vadd.f32 %v190, %v191
    %v193 = vrot.slane %v192, 1
    %v194 = vadd.f32 %v192, %v193
    %s195 = vtos %v194
    %s196 = smul.f32 %s195, 0.013888889
    %s197 = sadd.f32 %s95, %s196
    %v198 = vmul.f32 %v21, %v177
    %200 = vrot.lane.b32.xlu0 %v198, 72
    %v201 = vpop.permute.xlu0 %200
    %v203 = vsel %vm185, %v201, 0.0
    %204 = vadd.xlane.f32.xlu0 %v203
    %v205 = vpop.xlane.xlu0 %204
    %v206 = vsub.f32 %v205, 1.0
    %v207 = vmul.f32 %v206, 0.5
    %v208 = vmax.f32 %v207, -1.0
    %v209 = vmin.f32 %v208, 1.0
    %v210 = vand.u32 2147483647, %v209
    %v211 = vmul.f32 %v210, -0.0187293
    %v212 = vadd.f32 %v211, 0.074261
    %v213 = vmul.f32 %v210, %v212
    %v214 = vadd.f32 %v213, -0.2121144
    %v215 = vmul.f32 %v210, %v214
    %v216 = vadd.f32 %v215, 1.5707288
    %v217 = vsub.f32 1.0, %v210
    %v218 = vmax.f32 %v217, 0.0
    %v219 = vrsqrt.pop %v218
    %v220 = vmul.f32 %v218, %v219
    %vm221 = vcmp.eq.f32.partialorder %v218, inf
    %v222 = vsel %vm221, %v218, %v220
    %vm223 = vcmp.eq.f32.partialorder %v218, 0.0
    %v224 = vand.u32 %v218, 2147483648
    %v225 = vsel %vm223, %v224, %v222
    %v226 = vmul.f32 %v225, %v216
    %vm227 = vcmp.ge.f32.partialorder %v209, 0.0
    %v228 = vsub.f32 3.1415927, %v226
    %v229 = vsel %vm227, %v226, %v228
    %v230 = vsel %vm142, %v229, 0.0
    %231 = vadd.xlane.f32.xlu0 %v230
    %v232 = vpop.xlane.xlu0 %231
    %v233 = vrot.slane %v232, 4
    %v234 = vadd.f32 %v232, %v233
    %v235 = vrot.slane %v234, 2
    %v236 = vadd.f32 %v234, %v235
    %v237 = vrot.slane %v236, 1
    %v238 = vadd.f32 %v236, %v237
    %s239 = vtos %v238
    %s240 = smul.f32 %s239, 57.29578
    %s241 = smul.f32 %s240, 0.125
    %vm242 = vcmp.gt.f32.partialorder %v209, 0.9961947
    %v243 = vsel %vm242, 1, 0
    %v244 = vcvt.s32.f32 %v243
    %v245 = vsel %vm142, %v244, 0.0
    %246 = vadd.xlane.f32.xlu0 %v245
    %v247 = vpop.xlane.xlu0 %246
    %v248 = vrot.slane %v247, 4
    %v249 = vadd.f32 %v247, %v248
    %v250 = vrot.slane %v249, 2
    %v251 = vadd.f32 %v249, %v250
    %v252 = vrot.slane %v251, 1
    %v253 = vadd.f32 %v251, %v252
    %s254 = vtos %v253
    %s255 = smul.f32 %s254, 0.125
    %s256 = scalar_lea.smem [#allocation5], 0
    %257 = sst [smem:[%s256]] %s197
    %s258 = scalar_lea.smem [#allocation5], 1
    %259 = sst [smem:[%s258]] %s95
    %s260 = scalar_lea.smem [#allocation5], 2
    %261 = sst [smem:[%s260]] %s196
    %s262 = scalar_lea.smem [#allocation5], 3
    %263 = sst [smem:[%s262]] %s154
    %s264 = scalar_lea.smem [#allocation5], 4
    %265 = sst [smem:[%s264]] %s175
    %s266 = scalar_lea.smem [#allocation5], 5
    %267 = sst [smem:[%s266]] %s241
    %s268 = scalar_lea.smem [#allocation5], 6
    %269 = sst [smem:[%s268]] %s255
    %s270 = scalar_lea.smem [#allocation5], 7
    %271 = sst [smem:[%s270]] 0.0
    // Predicated region
    $region10: #{tpu_custom_call.1} parent=1 // pred_check
      _
    $region11: #{tpu_custom_call.1} parent=1 // pred_check_branch
      %273 = sbr.rel (0) target = $region13
    $region12: #{tpu_custom_call.1} parent=1 // pred_region
      %s275 = ssub.s32 16, 16
      %276 = vsyncadd [#allocation4], %s275
      %279 = dma.smem_to_hbm [#allocation5], 16, %s1, [#allocation4]
    $region13: #{tpu_custom_call.1} parent=1 // pred_fallthru
      _
    // Predicated region
    $region14: #{tpu_custom_call.1} parent=1 // pred_check
      _
    $region15: #{tpu_custom_call.1} parent=1 // pred_check_branch
      %281 = sbr.rel (0) target = $region17
    $region16: #{tpu_custom_call.1} parent=1 // pred_region
      %282 = dma.done [#allocation4], 16
    $region17: #{tpu_custom_call.1} parent=1 // pred_fallthru
      _
    %283 = sfence
    %284 = vsyncpa [#allocation3], 1
    %285 = vsyncpa [#allocation4], 1

</llo_original>
